<compile_context>
chip_gen: v7x
topology: tpu7x:2x2x1
jax: 0.10.0
libtpu: 0.0.40
codegen_flags: <defaults>
</compile_context>

<pallas_src>
import functools

import jax
import jax.numpy as jnp
from jax.experimental import pallas as pl
from jax.experimental.pallas import tpu as pltpu

LANES = 128
SUBLANES = 8


def _cdiv(a, b):
    return -(-a // b)


def _round_up(a, b):
    return _cdiv(a, b) * b


def _chip_defaults():
    """(block_rows, num_core_splits) tuned per TPU generation."""
    try:
        kind = jax.devices()[0].device_kind.lower()
    except Exception:
        return 4096, 1
    if "v5 lite" in kind or "v5e" in kind or "v5litepod" in kind:
        return 2048, 1          # slower HBM; 1 MiB tiles already amortize overhead
    if "v7" in kind:
        return 4096, 2          # two TensorCores per chip
    return 4096, 1              # v6e and default


def _weighted_sum_jax(o, t, a, b, square):
    """Plain-JAX sum of the weighted error (used for tiny inputs / <128 tail)."""
    o = o.astype(jnp.float32)
    t = t.astype(jnp.float32)
    outtar = o * t
    sdl = jnp.exp(-b * (jnp.exp(outtar / (jnp.abs(outtar) + a)) - 1.0))
    err = jnp.square(o - t) if square else jnp.abs(o - t)
    return jnp.sum(err * (1.0 + sdl))


def _loss_kernel(out_ref, tgt_ref, part_ref, acc_ref, *, a, b, square,
                 rows_valid, block_rows, chunk_rows, steps, needs_mask,
                 approx_recip):
    c = pl.program_id(0)
    i = pl.program_id(1)

    @pl.when(i == 0)
    def _():
        acc_ref[...] = jnp.zeros_like(acc_ref)

    # Intended global row offset of this tile (index_map clamps the DMA block
    # index, but masking below uses the *intended* rows, so clamped duplicate
    # blocks contribute exactly zero).
    base_row = (c * steps + i) * block_rows
    nchunks = block_rows // chunk_rows

    def chunk_body(j, carry):
        r0 = pl.multiple_of(j * chunk_rows, chunk_rows)
        o = out_ref[pl.ds(r0, chunk_rows), :].astype(jnp.float32)
        t = tgt_ref[pl.ds(r0, chunk_rows), :].astype(jnp.float32)

        outtar = o * t
        denom = jnp.abs(outtar) + a
        if approx_recip:
            ratio = outtar * pl.reciprocal(denom, approx=True)
        else:
            ratio = outtar / denom
        # 1 / exp(b * (exp(x) - 1)) == exp(-b * (exp(x) - 1))
        sign_diff_loss = jnp.exp(-b * (jnp.exp(ratio) - 1.0))

        diff = o - t
        err = diff * diff if square else jnp.abs(diff)
        weighted = err * (1.0 + sign_diff_loss)

        if needs_mask:
            # Rows >= rows_valid are boundary padding (or a clamped duplicate
            # block); select semantics also squash any NaN/Inf produced from
            # garbage bits in the padded region.
            grow = (base_row + r0
                    + jax.lax.broadcasted_iota(jnp.int32,
                                               (chunk_rows, LANES), 0))
            weighted = jnp.where(grow < rows_valid, weighted, 0.0)

        # (chunk_rows, 128) -> (8, 128): pure vreg-wise VPU adds.
        acc_ref[...] += jnp.sum(
            weighted.reshape(chunk_rows // SUBLANES, SUBLANES, LANES), axis=0)
        return carry

    jax.lax.fori_loop(0, nchunks, chunk_body, 0, unroll=True)

    @pl.when(i == pl.num_programs(1) - 1)
    def _():
        # One sublane reduce per core; lane-dense (1, 128) partial output.
        part_ref[...] = jnp.sum(acc_ref[...], axis=0, keepdims=True)


def limit_space_focused_loss(output, target, a=0.04, b=3.0, square=True,
                             block_rows=None, num_core_splits=None,
                             approx_recip=False):
    assert output.shape == target.shape
    n = output.size

    chip_br, chip_splits = _chip_defaults()
    if block_rows is None:
        block_rows = chip_br
    if num_core_splits is None:
        num_core_splits = chip_splits
    assert block_rows % SUBLANES == 0 and block_rows >= SUBLANES
    num_core_splits = max(1, int(num_core_splits))

    of = output.reshape(-1)
    tf = target.reshape(-1)

    rows = n // LANES           # full 128-lane rows handled by the kernel
    rem = n - rows * LANES      # <128-element tail handled in plain JAX

    if rows < SUBLANES:
        # Tiny input: a kernel launch isn't worth it.
        return _weighted_sum_jax(of, tf, a, b, square) / jnp.float32(n)

    if rem:
        # No padded copy of the inputs; only the (rare) ragged case takes a
        # zero-offset bulk slice, and the <128-element tail is reduced in JAX.
        tail = _weighted_sum_jax(of[rows * LANES:], tf[rows * LANES:],
                                 a, b, square)
        of = of[:rows * LANES]
        tf = tf[:rows * LANES]
    else:
        tail = jnp.float32(0.0)

    o2 = of.reshape(rows, LANES)
    t2 = tf.reshape(rows, LANES)

    # Tile size: as large as requested, but never larger than the array (so a
    # block never exceeds the array extent) and no larger than one core's share
    # (so multi-core splits actually use both cores on medium inputs).
    share = _round_up(_cdiv(rows, num_core_splits), SUBLANES)
    br = min(block_rows, (rows // SUBLANES) * SUBLANES, share)
    nblocks = _cdiv(rows, br)
    splits = max(1, min(num_core_splits, nblocks))
    steps = _cdiv(nblocks, splits)
    last_block = nblocks - 1

    # Strip-mine chunk: bounds elementwise-temporary footprint independently of
    # the DMA tile size.
    if br % 512 == 0:
        chunk = 512
    elif br % 256 == 0:
        chunk = 256
    else:
        chunk = br

    # Masking only needed when the grid covers more rows than actually exist.
    needs_mask = splits * steps * br > rows

    kernel = functools.partial(
        _loss_kernel, a=float(a), b=float(b), square=bool(square),
        rows_valid=rows, block_rows=br, chunk_rows=chunk, steps=steps,
        needs_mask=needs_mask, approx_recip=bool(approx_recip))

    # Explicit VMEM budget: 2 inputs x 2 pipeline buffers x tile, generous
    # allowance for f32 chunk temporaries, plus scratch/partials slack.
    in_bytes = (jnp.dtype(output.dtype).itemsize
                + jnp.dtype(target.dtype).itemsize)
    budget = (2 * br * LANES * in_bytes
              + 16 * chunk * LANES * 4
              + (2 << 20))
    vmem_limit = int(min(64 << 20, max(32 << 20, budget)))

    partials = pl.pallas_call(
        kernel,
        out_shape=jax.ShapeDtypeStruct((splits, LANES), jnp.float32),
        grid_spec=pltpu.PrefetchScalarGridSpec(
            num_scalar_prefetch=0,
            grid=(splits, steps),
            in_specs=[
                pl.BlockSpec(
                    (br, LANES),
                    lambda c, i: (jnp.minimum(c * steps + i, last_block), 0)),
                pl.BlockSpec(
                    (br, LANES),
                    lambda c, i: (jnp.minimum(c * steps + i, last_block), 0)),
            ],
            out_specs=pl.BlockSpec((1, LANES), lambda c, i: (c, 0)),
            scratch_shapes=[pltpu.VMEM((SUBLANES, LANES), jnp.float32)],
        ),
        compiler_params=pltpu.CompilerParams(
            dimension_semantics=("parallel", "arbitrary"),
            vmem_limit_bytes=vmem_limit),
    )(o2, t2)

    # Tiny final reduce of (splits, 128) partials + tail + divide by TRUE n.
    return (jnp.sum(partials) + tail) / jnp.float32(n)


def _reference(output, target, a=0.04, b=3.0, square=True):
    o = output.astype(jnp.float32)
    t = target.astype(jnp.float32)
    outtar = o * t
    sdl = 1.0 / jnp.exp(b * (jnp.exp(outtar / (jnp.abs(outtar) + a)) - 1.0))
    err = jnp.square(o - t) if square else jnp.abs(o - t)
    return jnp.mean(err * (1.0 + sdl))


if __name__ == "__main__":
    key = jax.random.PRNGKey(0)
    k1, k2, k3, k4 = jax.random.split(key, 4)

    # Case 1: regression-style batch, size divides 128 (no masking), square=True.
    out1 = jax.random.normal(k1, (2, 4, 16, 16), dtype=jnp.float32)
    tgt1 = jax.random.normal(k2, (2, 4, 16, 16), dtype=jnp.float32)
    loss1 = limit_space_focused_loss(out1, tgt1, a=0.04, b=3.0, square=True)
    jax.block_until_ready(loss1)
    ref1 = _reference(out1, tgt1, a=0.04, b=3.0, square=True)
    assert jnp.allclose(loss1, ref1, rtol=1e-5, atol=1e-6), (loss1, ref1)

    # Case 2: odd element count (exercises in-kernel row masking + JAX tail),
    # square=False.
    out2 = jax.random.normal(k3, (3, 5, 7, 11), dtype=jnp.float32)
    tgt2 = jax.random.normal(k4, (3, 5, 7, 11), dtype=jnp.float32)
    loss2 = limit_space_focused_loss(out2, tgt2, a=0.04, b=3.0, square=False)
    jax.block_until_ready(loss2)
    ref2 = _reference(out2, tgt2, a=0.04, b=3.0, square=False)
    assert jnp.allclose(loss2, ref2, rtol=1e-5, atol=1e-6), (loss2, ref2)

    print("KERNEL_OK")
</pallas_src>

<mosaic_0001>
module attributes {stable_mosaic.version = 11 : i64} {
  func.func @_loss_kernel(%arg0: i32, %arg1: i32, %arg2: memref<16x128xf32, #tpu.memory_space<vmem>>, %arg3: memref<16x128xf32, #tpu.memory_space<vmem>>, %arg4: memref<1x128xf32, #tpu.memory_space<vmem>>, %arg5: memref<8x128xf32, #tpu.memory_space<vmem>>) attributes {dimension_semantics = [#tpu.dimension_semantics<parallel>, #tpu.dimension_semantics<arbitrary>], iteration_bounds = array<i64: 1, 1>, scalar_prefetch = 0 : i64, scratch_operands = 1 : i64, tpu.core_type = #tpu.core_type<tc>, window_params = [{transform_indices = @transform_0, window_bounds = array<i64: 16, 128>}, {transform_indices = @transform_1, window_bounds = array<i64: 16, 128>}, {transform_indices = @transform_2, window_bounds = array<i64: 1, 128>}]} {
    %c0_i32 = arith.constant 0 : i32
    %0 = arith.cmpi eq, %arg1, %c0_i32 : i32
    %1 = arith.extui %0 : i1 to i32
    %c0_i32_0 = arith.constant 0 : i32
    %2 = arith.cmpi ne, %1, %c0_i32_0 : i32
    scf.if %2 {
      %cst_13 = arith.constant 0.000000e+00 : f32
      %33 = vector.broadcast %cst_13 : f32 to vector<8x128xf32>
      %c0_14 = arith.constant 0 : index
      %c0_15 = arith.constant 0 : index
      %34 = vector.load %arg5[%c0_14, %c0_15] : memref<8x128xf32, #tpu.memory_space<vmem>>, vector<8x128xf32>
      tpu.vector_store %arg5[%c0_14, %c0_15], %33 {strides = array<i32>} : memref<8x128xf32, #tpu.memory_space<vmem>>, vector<8x128xf32>,
    } else {
    }
    %c0_i32_1 = arith.constant 0 : i32
    %c16_i32 = arith.constant 16 : i32
    %3 = arith.muli %c0_i32_1, %c16_i32 : i32
    %4 = tpu.assume_multiple %3, 16 : i32
    %5 = arith.index_cast %4 : i32 to index
    %c0 = arith.constant 0 : index
    %6 = vector.load %arg2[%5, %c0] : memref<16x128xf32, #tpu.memory_space<vmem>>, vector<16x128xf32>
    %7 = arith.index_cast %4 : i32 to index
    %c0_2 = arith.constant 0 : index
    %8 = vector.load %arg3[%7, %c0_2] : memref<16x128xf32, #tpu.memory_space<vmem>>, vector<16x128xf32>
    %9 = arith.mulf %6, %8 : vector<16x128xf32>
    %10 = math.absf %9 : vector<16x128xf32>
    %cst = arith.constant 4.000000e-02 : f32
    %11 = vector.broadcast %cst : f32 to vector<16x128xf32>
    %12 = arith.addf %10, %11 : vector<16x128xf32>
    %13 = arith.divf %9, %12 : vector<16x128xf32>
    %14 = math.exp %13 : vector<16x128xf32>
    %cst_3 = arith.constant 1.000000e+00 : f32
    %15 = vector.broadcast %cst_3 : f32 to vector<16x128xf32>
    %16 = arith.subf %14, %15 : vector<16x128xf32>
    %cst_4 = arith.constant -3.000000e+00 : f32
    %17 = vector.broadcast %cst_4 : f32 to vector<16x128xf32>
    %18 = arith.mulf %17, %16 : vector<16x128xf32>
    %19 = math.exp %18 : vector<16x128xf32>
    %20 = arith.subf %6, %8 : vector<16x128xf32>
    %21 = arith.mulf %20, %20 : vector<16x128xf32>
    %cst_5 = arith.constant 1.000000e+00 : f32
    %22 = vector.broadcast %cst_5 : f32 to vector<16x128xf32>
    %23 = arith.addf %22, %19 : vector<16x128xf32>
    %24 = arith.mulf %21, %23 : vector<16x128xf32>
    %c0_6 = arith.constant 0 : index
    %c0_7 = arith.constant 0 : index
    %25 = vector.load %arg5[%c0_6, %c0_7] : memref<8x128xf32, #tpu.memory_space<vmem>>, vector<8x128xf32>
    %26 = vector.shape_cast %24 : vector<16x128xf32> to vector<2x8x128xf32>
    %cst_8 = arith.constant dense<0.000000e+00> : vector<8x128xf32>
    %27 = vector.multi_reduction <add>, %26, %cst_8 [0] : vector<2x8x128xf32> to vector<8x128xf32>
    %28 = arith.addf %25, %27 : vector<8x128xf32>
    %c0_9 = arith.constant 0 : index
    %c0_10 = arith.constant 0 : index
    %29 = vector.load %arg5[%c0_9, %c0_10] : memref<8x128xf32, #tpu.memory_space<vmem>>, vector<8x128xf32>
    tpu.vector_store %arg5[%c0_9, %c0_10], %28 {strides = array<i32>} : memref<8x128xf32, #tpu.memory_space<vmem>>, vector<8x128xf32>,
    %c1_i32 = arith.constant 1 : i32
    %c0_i32_11 = arith.constant 0 : i32
    %30 = arith.cmpi eq, %arg1, %c0_i32_11 : i32
    %31 = arith.extui %30 : i1 to i32
    %c0_i32_12 = arith.constant 0 : i32
    %32 = arith.cmpi ne, %31, %c0_i32_12 : i32
    scf.if %32 {
      %c0_13 = arith.constant 0 : index
      %c0_14 = arith.constant 0 : index
      %33 = vector.load %arg5[%c0_13, %c0_14] : memref<8x128xf32, #tpu.memory_space<vmem>>, vector<8x128xf32>
      %cst_15 = arith.constant dense<0.000000e+00> : vector<128xf32>
      %34 = vector.multi_reduction <add>, %33, %cst_15 [0] : vector<8x128xf32> to vector<128xf32>
      %35 = vector.shape_cast %34 : vector<128xf32> to vector<1x128xf32>
      %c0_16 = arith.constant 0 : index
      %c0_17 = arith.constant 0 : index
      %36 = vector.load %arg4[%c0_16, %c0_17] : memref<1x128xf32, #tpu.memory_space<vmem>>, vector<1x128xf32>
      tpu.vector_store %arg4[%c0_16, %c0_17], %35 {strides = array<i32>} : memref<1x128xf32, #tpu.memory_space<vmem>>, vector<1x128xf32>,
    } else {
    }
    return
  }
  func.func @transform_0(%arg0: i32, %arg1: i32) -> (i32, i32) {
    %c1_i32 = arith.constant 1 : i32
    %0 = arith.muli %arg0, %c1_i32 : i32
    %1 = arith.addi %0, %arg1 : i32
    %c0_i32 = arith.constant 0 : i32
    %2 = arith.minsi %1, %c0_i32 : i32
    %c0_i32_0 = arith.constant 0 : i32
    %c0_i32_1 = arith.constant 0 : i32
    return %2, %c0_i32_0 : i32, i32
  }
  func.func @transform_1(%arg0: i32, %arg1: i32) -> (i32, i32) {
    %c1_i32 = arith.constant 1 : i32
    %0 = arith.muli %arg0, %c1_i32 : i32
    %1 = arith.addi %0, %arg1 : i32
    %c0_i32 = arith.constant 0 : i32
    %2 = arith.minsi %1, %c0_i32 : i32
    %c0_i32_0 = arith.constant 0 : i32
    %c0_i32_1 = arith.constant 0 : i32
    return %2, %c0_i32_0 : i32, i32
  }
  func.func @transform_2(%arg0: i32, %arg1: i32) -> (i32, i32) {
    %c0_i32 = arith.constant 0 : i32
    %c0_i32_0 = arith.constant 0 : i32
    return %arg0, %c0_i32 : i32, i32
  }
}

</mosaic_0001>

<llo_original>
// kernel: tpu_custom_call.1
$region0: #{tpu_custom_call.1}
  #allocation0 [shape = 'u32[]', space=smem, size = 0x4, offset = 0x4, fixed_abs, tag = 'smem constant byte address 0x4 - core index']
  #allocation1 [shape = 'u32[144,128]{1,0:T(1,128)}', space=vmem, size = 0x12000, scoped, tag = 'internal scratch']
  #allocation2 [shape = 'f32[8,128]{1,0:T(8,128)}', space=vmem, size = 0x1000, scoped, tag = 'scratch operand']
  %s0 = inlined_call_operand.hbm [shape: f32[16,128], index: 0, kind: input, shape index: {}]
  %s1 = inlined_call_operand.hbm [shape: f32[16,128], index: 1, kind: input, shape index: {}]
  %s2 = inlined_call_operand.hbm [shape: f32[1,128], index: 2, kind: output, shape index: {}]
  %s3 = sld [smem:[#allocation0]]
  $region34: #{tpu_custom_call.1} parent=0
    _
  %s5 = ssub.s32 1, %s3
  %s6 = scalar_select 0, %s5, %s3
  $region1: #{tpu_custom_call.1} parent=0
    #allocation3 [shape = 'u8[8192]{0}', space=vmem, size = 0x2000, scoped, tag = 'input window, operand 0, single buffered']
    #allocation4 [shape = 's32[1]{0}', space=sflag, size = 0x4, scoped, tag = 'scoped memory for tpu_custom_call.1']
    #allocation5 [shape = 's32[1]{0}', space=sflag, size = 0x4, scoped, tag = 'scoped memory for tpu_custom_call.1']
    #allocation6 [shape = 'u8[8192]{0}', space=vmem, size = 0x2000, scoped, tag = 'input window, operand 1, single buffered']
    #allocation7 [shape = 's32[1]{0}', space=sflag, size = 0x4, scoped, tag = 'scoped memory for tpu_custom_call.1']
    #allocation8 [shape = 'u8[512]{0}', space=vmem, size = 0x400, scoped, tag = 'output window, operand 0, single buffered']
    %7 = vsyncpa [#allocation4], 0
    %8 = vsyncpa [#allocation7], 0
    %9 = vsyncpa [#allocation5], 0
    // Predicated region
    $region2: #{tpu_custom_call.1} parent=1 // pred_check
      _
    $region3: #{tpu_custom_call.1} parent=1 // pred_check_branch
      %11 = sbr.rel (0) target = $region5
    $region4: #{tpu_custom_call.1} parent=1 // pred_region
      %s12 = sadd.s32 0, 0
      %p13 = scmp.lt.s32.totalorder %s12, 0
      %s14 = scalar_select %p13, %s12, 0
      %s15 = smul.u32 2, %s14
      %s17 = ssub.s32 256, 256
      %18 = vsyncadd [#allocation4], %s17
      %s19 = smul.addr %s15, 128
      %s20 = scalar_lea.hbm %s0, %s19
      %s21 = sshll.u32 [#allocation3], 4
      %s22 = int_to_ptr.vmem [resolvable:$true] %s21
      %27 = dma.hbm_to_vmem [thread:$0]  %s20, 256, %s22, [#allocation4], 128, 128, 8
    $region5: #{tpu_custom_call.1} parent=1 // pred_fallthru
      _
    // Predicated region
    $region6: #{tpu_custom_call.1} parent=1 // pred_check
      _
    $region7: #{tpu_custom_call.1} parent=1 // pred_check_branch
      %29 = sbr.rel (0) target = $region9
    $region8: #{tpu_custom_call.1} parent=1 // pred_region
      %s30 = sadd.s32 0, 0
      %p31 = scmp.lt.s32.totalorder %s30, 0
      %s32 = scalar_select %p31, %s30, 0
      %s33 = smul.u32 2, %s32
      %s35 = ssub.s32 256, 256
      %36 = vsyncadd [#allocation7], %s35
      %s37 = smul.addr %s33, 128
      %s38 = scalar_lea.hbm %s1, %s37
      %s39 = sshll.u32 [#allocation6], 4
      %s40 = int_to_ptr.vmem [resolvable:$true] %s39
      %45 = dma.hbm_to_vmem [thread:$0]  %s38, 256, %s40, [#allocation7], 128, 128, 8
    $region9: #{tpu_custom_call.1} parent=1 // pred_fallthru
      _
    // Predicated region
    $region10: #{tpu_custom_call.1} parent=1 // pred_check
      _
    $region11: #{tpu_custom_call.1} parent=1 // pred_check_branch
      %47 = sbr.rel (0) target = $region13
    $region12: #{tpu_custom_call.1} parent=1 // pred_region
      %48 = dma.done [#allocation4], 256
    $region13: #{tpu_custom_call.1} parent=1 // pred_fallthru
      _
    // Predicated region
    $region14: #{tpu_custom_call.1} parent=1 // pred_check
      _
    $region15: #{tpu_custom_call.1} parent=1 // pred_check_branch
      %50 = sbr.rel (0) target = $region17
    $region16: #{tpu_custom_call.1} parent=1 // pred_region
      %51 = dma.done [#allocation7], 256
    $region17: #{tpu_custom_call.1} parent=1 // pred_fallthru
      _
    %s52 = sadd.s32 0, 0
    %p53 = scmp.lt.s32.totalorder %s52, 0
    %s54 = scalar_select %p53, %s52, 0
    %s55 = smul.u32 2, %s54
    %s56 = sadd.s32 0, 0
    %p57 = scmp.lt.s32.totalorder %s56, 0
    %s58 = scalar_select %p57, %s56, 0
    %s59 = smul.u32 2, %s58
    %p60 = scmp.eq.s32.totalorder 0, 0
    // Predicated region
    $region18: #{tpu_custom_call.1} parent=1 // pred_check
      %p61 = pneg %p60
    $region19: #{tpu_custom_call.1} parent=1 // pred_check_branch
      %63 = sbr.rel (%p61) target = $region21
    $region20: #{tpu_custom_call.1} parent=1 // pred_region
      %64 = vst [vmem:[#allocation2] sm:$0xff] 0.0
    $region21: #{tpu_custom_call.1} parent=1 // pred_fallthru
      _
    %v65 = vld [vmem:[#allocation3] sm:$0xff]
    %v66 = vld [vmem:[#allocation3 + $0x8] sm:$0xff]
    %v67 = vld [vmem:[#allocation6] sm:$0xff]
    %v68 = vld [vmem:[#allocation6 + $0x8] sm:$0xff]
    %v69 = vmul.f32 %v65, %v67
    %v70 = vmul.f32 %v66, %v68
    %v71 = vand.u32 2147483647, %v69
    %v72 = vand.u32 2147483647, %v70
    %v73 = vadd.f32 %v71, 0.04
    %v74 = vadd.f32 %v72, 0.04
    %v75 = vrcp.pop %v73
    %v76 = vmul.f32 %v69, %v75
    %v77 = vrcp.pop %v74
    %v78 = vmul.f32 %v70, %v77
    %v79 = vmul.f32 %v76, 1.442695
    %v80 = vpow.pop %v79
    %v81 = vmul.f32 %v78, 1.442695
    %v82 = vpow.pop %v81
    %v83 = vsub.f32 %v80, 1.0
    %v84 = vsub.f32 %v82, 1.0
    %v85 = vmul.f32 %v83, -3.0
    %v86 = vmul.f32 %v84, -3.0
    %v87 = vmul.f32 %v85, 1.442695
    %v88 = vpow.pop %v87
    %v89 = vmul.f32 %v86, 1.442695
    %v90 = vpow.pop %v89
    %v91 = vsub.f32 %v65, %v67
    %v92 = vsub.f32 %v66, %v68
    %v93 = vmul.f32 %v91, %v91
    %v94 = vmul.f32 %v92, %v92
    %v95 = vadd.f32 %v88, 1.0
    %v96 = vadd.f32 %v90, 1.0
    %v97 = vmul.f32 %v93, %v95
    %v98 = vmul.f32 %v94, %v96
    %v99 = vld [vmem:[#allocation2] sm:$0xff]
    %v100 = vadd.f32 %v97, %v98
    %v101 = vadd.f32 %v99, %v100
    %102 = vst [vmem:[#allocation2] sm:$0xff] %v101
    // Predicated region
    $region22: #{tpu_custom_call.1} parent=1 // pred_check
      %p103 = pneg %p60
    $region23: #{tpu_custom_call.1} parent=1 // pred_check_branch
      %105 = sbr.rel (%p103) target = $region25
    $region24: #{tpu_custom_call.1} parent=1 // pred_region
      %v106 = vld [vmem:[#allocation2] sm:$0xff]
      %v107 = vrot.slane %v106, 4
      %v108 = vadd.f32 %v106, %v107
      %v109 = vrot.slane %v108, 2
      %v110 = vadd.f32 %v108, %v109
      %v111 = vrot.slane %v110, 1
      %v112 = vadd.f32 %v110, %v111
      %113 = vst [vmem:[#allocation8] sm:$0x1] %v112
    $region25: #{tpu_custom_call.1} parent=1 // pred_fallthru
      _
    // Predicated region
    $region26: #{tpu_custom_call.1} parent=1 // pred_check
      _
    $region27: #{tpu_custom_call.1} parent=1 // pred_check_branch
      %115 = sbr.rel (0) target = $region29
    $region28: #{tpu_custom_call.1} parent=1 // pred_region
      %s117 = ssub.s32 16, 16
      %118 = vsyncadd [#allocation5], %s117
      %s120 = sshll.u32 [#allocation8], 4
      %s121 = int_to_ptr.vmem [resolvable:$true] %s120
      %123 = dma.vmem_to_hbm [thread:$0]  %s121, 16, %s2, [#allocation5]
    $region29: #{tpu_custom_call.1} parent=1 // pred_fallthru
      _
    // Predicated region
    $region30: #{tpu_custom_call.1} parent=1 // pred_check
      _
    $region31: #{tpu_custom_call.1} parent=1 // pred_check_branch
      %125 = sbr.rel (0) target = $region33
    $region32: #{tpu_custom_call.1} parent=1 // pred_region
      %126 = dma.done [#allocation5], 16
    $region33: #{tpu_custom_call.1} parent=1 // pred_fallthru
      _
    %127 = vsyncpa [#allocation4], 1
    %128 = vsyncpa [#allocation7], 1
    %129 = vsyncpa [#allocation5], 1

</llo_original>
